<compile_context>
chip_gen: v6e
topology: v6e:2x2x1
jax: 0.10.0
libtpu: 0.0.40
codegen_flags: <defaults>
</compile_context>

<pallas_src>
import functools

import jax
import jax.numpy as jnp
from jax.experimental import pallas as pl
from jax.experimental.pallas import tpu as pltpu

SUBLANE = 8  # f32 sublane count


def _round_up(x, m):
    return (x + m - 1) // m * m


def dqn_kernel(x_ref, w1_ref, b1_ref, w2_ref, b2_ref, w3_ref, b3_ref, o_ref):
    # One grid step = one (tb, input_dim) activation tile.  Weights/biases are
    # pinned, single-buffered VMEM blocks; per-step DMA is only x in / q out.
    wdt = w1_ref.dtype  # f32 by default, bf16 if caller opted in
    x = x_ref[...].astype(wdt)
    h1 = jnp.dot(x, w1_ref[...], preferred_element_type=jnp.float32)
    h1 = jnp.maximum(h1 + b1_ref[...].astype(jnp.float32), 0.0)
    h2 = jnp.dot(h1.astype(wdt), w2_ref[...], preferred_element_type=jnp.float32)
    h2 = jnp.maximum(h2 + b2_ref[...].astype(jnp.float32), 0.0)
    q = jnp.dot(h2.astype(wdt), w3_ref[...], preferred_element_type=jnp.float32)
    o_ref[...] = (q + b3_ref[...].astype(jnp.float32)).astype(o_ref.dtype)


@functools.partial(jax.jit, static_argnames=("block_batch",))
def dqn_forward(x, w1, b1, w2, b2, w3, b3, *, block_batch=512):
    batch, input_dim = x.shape
    hidden = w1.shape[1]
    num_actions = w3.shape[1]

    # Batch tile: large enough to amortize per-step overhead, but split large
    # batches into >= 2 grid steps so v7x's two TensorCores both get work.
    # tb is either the full batch dim or a multiple of 8 (the (8,128) rule).
    if batch <= SUBLANE:
        tb = batch
    else:
        tb = min(block_batch, _round_up(pl.cdiv(batch, 2), SUBLANE))
    grid = (pl.cdiv(batch, tb),)

    # Advisory cost for XLA's scheduler: real (unpadded) flops / bytes.
    wbytes = w1.dtype.itemsize
    flops = 2 * batch * (input_dim * hidden + hidden * hidden + hidden * num_actions)
    bytes_accessed = (
        x.dtype.itemsize * batch * input_dim
        + wbytes * (input_dim * hidden + hidden * hidden + hidden * num_actions)
        + b1.dtype.itemsize * (2 * hidden + num_actions)
        + 4 * batch * num_actions
    )

    resident = dict(pipeline_mode=pl.Buffered(1))  # never-changing blocks: 1 buffer

    return pl.pallas_call(
        dqn_kernel,
        out_shape=jax.ShapeDtypeStruct((batch, num_actions), jnp.float32),
        grid_spec=pltpu.PrefetchScalarGridSpec(
            num_scalar_prefetch=0,
            grid=grid,
            in_specs=[
                pl.BlockSpec((tb, input_dim), lambda i: (i, 0)),                 # x tile
                pl.BlockSpec((input_dim, hidden), lambda i: (0, 0), **resident),  # w1
                pl.BlockSpec((1, hidden), lambda i: (0, 0), **resident),          # b1
                pl.BlockSpec((hidden, hidden), lambda i: (0, 0), **resident),     # w2
                pl.BlockSpec((1, hidden), lambda i: (0, 0), **resident),          # b2
                pl.BlockSpec((hidden, num_actions), lambda i: (0, 0), **resident),# w3
                pl.BlockSpec((1, num_actions), lambda i: (0, 0), **resident),     # b3
            ],
            out_specs=pl.BlockSpec((tb, num_actions), lambda i: (i, 0)),
        ),
        compiler_params=pltpu.CompilerParams(
            dimension_semantics=("parallel",),  # batch tiles shard across TCs on v7x
        ),
        cost_estimate=pl.CostEstimate(
            flops=flops, transcendentals=0, bytes_accessed=bytes_accessed
        ),
    )(x, w1, b1, w2, b2, w3, b3)


def xavier_uniform(key, fan_in, fan_out):
    # Matches nn.init.xavier_uniform_: bound = sqrt(6 / (fan_in + fan_out)).
    bound = (6.0 / (fan_in + fan_out)) ** 0.5
    return jax.random.uniform(
        key, (fan_in, fan_out), dtype=jnp.float32, minval=-bound, maxval=bound
    )


def make_params(key, input_dim, num_actions, hidden_units):
    k1, k2, k3 = jax.random.split(key, 3)
    w1 = xavier_uniform(k1, input_dim, hidden_units)
    b1 = jnp.zeros((1, hidden_units), jnp.float32)
    w2 = xavier_uniform(k2, hidden_units, hidden_units)
    b2 = jnp.zeros((1, hidden_units), jnp.float32)
    w3 = xavier_uniform(k3, hidden_units, num_actions)
    b3 = jnp.zeros((1, num_actions), jnp.float32)
    return w1, b1, w2, b2, w3, b3


def reference_forward(x, w1, b1, w2, b2, w3, b3):
    h1 = jnp.maximum(x @ w1 + b1, 0.0)
    h2 = jnp.maximum(h1 @ w2 + b2, 0.0)
    return h2 @ w3 + b3


if __name__ == "__main__":
    # Small shapes consistent with DQN(input_dim=32, num_actions=8,
    # hidden_units=32); batch=32 exercises the 2-step batch grid.
    batch, input_dim, num_actions, hidden_units = 32, 32, 8, 32

    key = jax.random.PRNGKey(0)
    kx, kp = jax.random.split(key)
    x = jax.random.normal(kx, (batch, input_dim), dtype=jnp.float32)
    params = make_params(kp, input_dim, num_actions, hidden_units)

    out = jax.block_until_ready(dqn_forward(x, *params))

    ref = reference_forward(x, *params)
    assert out.shape == (batch, num_actions)
    assert jnp.allclose(out, ref, atol=1e-5, rtol=1e-5)

    print("KERNEL_OK")
</pallas_src>

<mosaic_0001>
module attributes {stable_mosaic.version = 11 : i64} {
  func.func @dqn_kernel(%arg0: i32, %arg1: memref<16x32xf32, #tpu.memory_space<vmem>>, %arg2: memref<32x32xf32, #tpu.memory_space<vmem>>, %arg3: memref<1x32xf32, #tpu.memory_space<vmem>>, %arg4: memref<32x32xf32, #tpu.memory_space<vmem>>, %arg5: memref<1x32xf32, #tpu.memory_space<vmem>>, %arg6: memref<32x8xf32, #tpu.memory_space<vmem>>, %arg7: memref<1x8xf32, #tpu.memory_space<vmem>>, %arg8: memref<16x8xf32, #tpu.memory_space<vmem>>) attributes {dimension_semantics = [#tpu.dimension_semantics<parallel>], iteration_bounds = array<i64: 2>, scalar_prefetch = 0 : i64, scratch_operands = 0 : i64, tpu.core_type = #tpu.core_type<tc>, window_params = [{transform_indices = @transform_0, window_bounds = array<i64: 16, 32>}, {pipeline_mode = #tpu.pipeline_mode<synchronous>, transform_indices = @transform_1, window_bounds = array<i64: 32, 32>}, {pipeline_mode = #tpu.pipeline_mode<synchronous>, transform_indices = @transform_2, window_bounds = array<i64: 1, 32>}, {pipeline_mode = #tpu.pipeline_mode<synchronous>, transform_indices = @transform_3, window_bounds = array<i64: 32, 32>}, {pipeline_mode = #tpu.pipeline_mode<synchronous>, transform_indices = @transform_4, window_bounds = array<i64: 1, 32>}, {pipeline_mode = #tpu.pipeline_mode<synchronous>, transform_indices = @transform_5, window_bounds = array<i64: 32, 8>}, {pipeline_mode = #tpu.pipeline_mode<synchronous>, transform_indices = @transform_6, window_bounds = array<i64: 1, 8>}, {transform_indices = @transform_7, window_bounds = array<i64: 16, 8>}]} {
    %c0 = arith.constant 0 : index
    %c0_0 = arith.constant 0 : index
    %0 = vector.load %arg1[%c0, %c0_0] : memref<16x32xf32, #tpu.memory_space<vmem>>, vector<16x32xf32>
    %c0_1 = arith.constant 0 : index
    %c0_2 = arith.constant 0 : index
    %1 = vector.load %arg2[%c0_1, %c0_2] : memref<32x32xf32, #tpu.memory_space<vmem>>, vector<32x32xf32>
    %cst = arith.constant dense<0.000000e+00> : vector<16x32xf32>
    %2 = tpu.matmul %0, %1, %cst {dimension_numbers = #tpu.dot_dimension_numbers<[1], [0], [0], [1], [0, 0, 1, 1], [], []>} : vector<16x32xf32>, vector<32x32xf32>, vector<16x32xf32> -> vector<16x32xf32>
    %c0_3 = arith.constant 0 : index
    %c0_4 = arith.constant 0 : index
    %3 = vector.load %arg3[%c0_3, %c0_4] : memref<1x32xf32, #tpu.memory_space<vmem>>, vector<1x32xf32>
    %4 = vector.broadcast %3 : vector<1x32xf32> to vector<16x32xf32>
    %5 = arith.addf %2, %4 : vector<16x32xf32>
    %cst_5 = arith.constant 0.000000e+00 : f32
    %6 = vector.broadcast %cst_5 : f32 to vector<16x32xf32>
    %7 = arith.maximumf %5, %6 : vector<16x32xf32>
    %c0_6 = arith.constant 0 : index
    %c0_7 = arith.constant 0 : index
    %8 = vector.load %arg4[%c0_6, %c0_7] : memref<32x32xf32, #tpu.memory_space<vmem>>, vector<32x32xf32>
    %cst_8 = arith.constant dense<0.000000e+00> : vector<16x32xf32>
    %9 = tpu.matmul %7, %8, %cst_8 {dimension_numbers = #tpu.dot_dimension_numbers<[1], [0], [0], [1], [0, 0, 1, 1], [], []>} : vector<16x32xf32>, vector<32x32xf32>, vector<16x32xf32> -> vector<16x32xf32>
    %c0_9 = arith.constant 0 : index
    %c0_10 = arith.constant 0 : index
    %10 = vector.load %arg5[%c0_9, %c0_10] : memref<1x32xf32, #tpu.memory_space<vmem>>, vector<1x32xf32>
    %11 = vector.broadcast %10 : vector<1x32xf32> to vector<16x32xf32>
    %12 = arith.addf %9, %11 : vector<16x32xf32>
    %cst_11 = arith.constant 0.000000e+00 : f32
    %13 = vector.broadcast %cst_11 : f32 to vector<16x32xf32>
    %14 = arith.maximumf %12, %13 : vector<16x32xf32>
    %c0_12 = arith.constant 0 : index
    %c0_13 = arith.constant 0 : index
    %15 = vector.load %arg6[%c0_12, %c0_13] : memref<32x8xf32, #tpu.memory_space<vmem>>, vector<32x8xf32>
    %cst_14 = arith.constant dense<0.000000e+00> : vector<16x8xf32>
    %16 = tpu.matmul %14, %15, %cst_14 {dimension_numbers = #tpu.dot_dimension_numbers<[1], [0], [0], [1], [0, 0, 1, 1], [], []>} : vector<16x32xf32>, vector<32x8xf32>, vector<16x8xf32> -> vector<16x8xf32>
    %c0_15 = arith.constant 0 : index
    %c0_16 = arith.constant 0 : index
    %17 = vector.load %arg7[%c0_15, %c0_16] : memref<1x8xf32, #tpu.memory_space<vmem>>, vector<1x8xf32>
    %18 = vector.broadcast %17 : vector<1x8xf32> to vector<16x8xf32>
    %19 = arith.addf %16, %18 : vector<16x8xf32>
    %c0_17 = arith.constant 0 : index
    %c0_18 = arith.constant 0 : index
    %20 = vector.load %arg8[%c0_17, %c0_18] : memref<16x8xf32, #tpu.memory_space<vmem>>, vector<16x8xf32>
    tpu.vector_store %arg8[%c0_17, %c0_18], %19 {strides = array<i32>} : memref<16x8xf32, #tpu.memory_space<vmem>>, vector<16x8xf32>,
    return
  }
  func.func @transform_0(%arg0: i32) -> (i32, i32) {
    %c0_i32 = arith.constant 0 : i32
    %c0_i32_0 = arith.constant 0 : i32
    return %arg0, %c0_i32 : i32, i32
  }
  func.func @transform_1(%arg0: i32) -> (i32, i32) {
    %c0_i32 = arith.constant 0 : i32
    %c0_i32_0 = arith.constant 0 : i32
    %c0_i32_1 = arith.constant 0 : i32
    return %c0_i32, %c0_i32_0 : i32, i32
  }
  func.func @transform_2(%arg0: i32) -> (i32, i32) {
    %c0_i32 = arith.constant 0 : i32
    %c0_i32_0 = arith.constant 0 : i32
    %c0_i32_1 = arith.constant 0 : i32
    return %c0_i32, %c0_i32_0 : i32, i32
  }
  func.func @transform_3(%arg0: i32) -> (i32, i32) {
    %c0_i32 = arith.constant 0 : i32
    %c0_i32_0 = arith.constant 0 : i32
    %c0_i32_1 = arith.constant 0 : i32
    return %c0_i32, %c0_i32_0 : i32, i32
  }
  func.func @transform_4(%arg0: i32) -> (i32, i32) {
    %c0_i32 = arith.constant 0 : i32
    %c0_i32_0 = arith.constant 0 : i32
    %c0_i32_1 = arith.constant 0 : i32
    return %c0_i32, %c0_i32_0 : i32, i32
  }
  func.func @transform_5(%arg0: i32) -> (i32, i32) {
    %c0_i32 = arith.constant 0 : i32
    %c0_i32_0 = arith.constant 0 : i32
    %c0_i32_1 = arith.constant 0 : i32
    return %c0_i32, %c0_i32_0 : i32, i32
  }
  func.func @transform_6(%arg0: i32) -> (i32, i32) {
    %c0_i32 = arith.constant 0 : i32
    %c0_i32_0 = arith.constant 0 : i32
    %c0_i32_1 = arith.constant 0 : i32
    return %c0_i32, %c0_i32_0 : i32, i32
  }
  func.func @transform_7(%arg0: i32) -> (i32, i32) {
    %c0_i32 = arith.constant 0 : i32
    %c0_i32_0 = arith.constant 0 : i32
    return %arg0, %c0_i32 : i32, i32
  }
}

</mosaic_0001>

<llo_original>
// kernel: dqn_forward.1
$region0: #{dqn_forward.1}
  #allocation0 [shape = 'u32[]', space=smem, size = 0x4, offset = 0x4, fixed_abs, tag = 'smem constant byte address 0x4 - core index']
  #allocation1 [shape = 'u32[144,128]{1,0:T(1,128)}', space=vmem, size = 0x12000, scoped, tag = 'internal scratch']
  %s0 = inlined_call_operand.vmem [shape: f32[32,32], index: 0, kind: input, shape index: {}]
  %s1 = inlined_call_operand.hbm [shape: f32[32,32], index: 1, kind: input, shape index: {}]
  %s2 = inlined_call_operand.vmem [shape: f32[1,32], index: 2, kind: input, shape index: {}]
  %s3 = inlined_call_operand.hbm [shape: f32[32,32], index: 3, kind: input, shape index: {}]
  %s4 = inlined_call_operand.vmem [shape: f32[1,32], index: 4, kind: input, shape index: {}]
  %s5 = inlined_call_operand.vmem [shape: f32[32,8], index: 5, kind: input, shape index: {}]
  %s6 = inlined_call_operand.vmem [shape: f32[1,8], index: 6, kind: input, shape index: {}]
  %s7 = inlined_call_operand.vmem [shape: f32[32,8], index: 7, kind: output, shape index: {}]
  %s8 = sld [smem:[#allocation0]]
  $region69: #{dqn_forward.1} parent=0
    _
  %s10 = ssub.s32 1, %s8
  %s11 = scalar_select 0, %s10, %s8
  $region1: #{dqn_forward.1} parent=0
    #allocation2 [shape = 'u8[16384]{0}', space=vmem, size = 0x4000, scoped, tag = 'input window, operand 1, single buffered']
    #allocation3 [shape = 's32[2]{0}', space=sflag, size = 0x8, scoped, tag = 'scoped memory for dqn_forward.1']
    #allocation4 [shape = 'u8[16384]{0}', space=vmem, size = 0x4000, scoped, tag = 'input window, operand 3, single buffered']
    #allocation5 [shape = 's32[1]{0}', space=sflag, size = 0x4, scoped, tag = 'scoped memory for dqn_forward.1']
    %12 = vsyncpa [#allocation3], 0
    %13 = vsyncpa [#allocation5], 0
    loop: start=0, step=1, limit=4
    $region2: #{dqn_forward.1} parent=1 // loop_pre_header
      _
    $region3: #{dqn_forward.1} parent=1 // loop_header
      %s15 = sphi 0, %s19
      %p16 = scmp.ge.s32.totalorder %s15, 4
      %s25 = sphi 0, %s27
      %s28 = sphi 0, %s25
      %s29 = sphi 0, %s28
      %s45 = sphi 0, %s29
      %s49 = sphi 0, %s49
      %s51 = sphi 0, %s49
      %s52 = sphi 0, %s51
      %s66 = sphi 0, %s52
      %s70 = sphi 0, %s70
      %s72 = sphi 0, %s70
      %s73 = sphi 0, %s72
      %s87 = sphi 0, %s73
      %s91 = sphi 0, %s91
      %s93 = sphi 0, %s91
      %s94 = sphi 0, %s93
      %s108 = sphi 0, %s94
      %s112 = sphi 0, %s112
      %s114 = sphi 0, %s112
      %s115 = sphi 0, %s114
      %s129 = sphi 0, %s115
      %s133 = sphi 0, %s133
      %s135 = sphi 0, %s133
      %s136 = sphi 0, %s135
      %s150 = sphi 0, %s136
      %s154 = sphi 0, %s154
      %s156 = sphi 0, %s154
      %s157 = sphi 0, %s156
      %s171 = sphi 0, %s157
      %s177 = sphi 0, %s179
      %s180 = sphi 0, %s177
      %s181 = sphi 0, %s180
      %s197 = sphi 0, %s181
    $region4: #{dqn_forward.1} parent=1 // loop_header_branch
      %18 = sbr.rel (%p16) target = $region8
    $region5: #{dqn_forward.1} parent=1 // loop_body
      %s20 = ssub.s32 %s15, 1
      %s21 = ssub.s32 %s15, 2
      %s22 = sadd.s32 %s15, 1
      %s23 = ssub.s32 %s15, %s22
      %p24 = scmp.eq.s32.totalorder %s23, 0
      %s26 = sadd.s32 %s25, 1
      %s27 = scalar_select %p24, %s25, %s26
      %p30 = pneg %p24
      %p31 = scmp.eq.s32.totalorder %s15, 1
      %p32 = por %p30, %p31
      %p33 = scmp.ne.s32.totalorder %s25, %s28
      %p34 = scmp.eq.s32.totalorder %s15, 0
      %p35 = por %p33, %p34
      %p36 = scmp.ne.s32.totalorder %s25, %s28
      %p37 = scmp.eq.s32.totalorder %s20, 1
      %p38 = por %p36, %p37
      %p39 = scmp.ne.s32.totalorder %s28, %s29
      %p40 = scmp.eq.s32.totalorder %s20, 0
      %p41 = por %p39, %p40
      %p42 = scmp.ne.s32.totalorder %s28, %s29
      %p43 = scmp.eq.s32.totalorder %s21, 1
      %p44 = por %p42, %p43
      %p46 = scmp.ne.s32.totalorder %s29, %s45
      %p47 = scmp.eq.s32.totalorder %s21, 0
      %p48 = por %p46, %p47
      %s50 = sadd.s32 %s49, 1
      %p53 = scmp.eq.s32.totalorder %s15, 1
      %p54 = scmp.ne.s32.totalorder %s49, %s51
      %p55 = scmp.eq.s32.totalorder %s15, 0
      %p56 = por %p54, %p55
      %p57 = scmp.ne.s32.totalorder %s49, %s51
      %p58 = scmp.eq.s32.totalorder %s20, 1
      %p59 = por %p57, %p58
      %p60 = scmp.ne.s32.totalorder %s51, %s52
      %p61 = scmp.eq.s32.totalorder %s20, 0
      %p62 = por %p60, %p61
      %p63 = scmp.ne.s32.totalorder %s51, %s52
      %p64 = scmp.eq.s32.totalorder %s21, 1
      %p65 = por %p63, %p64
      %p67 = scmp.ne.s32.totalorder %s52, %s66
      %p68 = scmp.eq.s32.totalorder %s21, 0
      %p69 = por %p67, %p68
      %s71 = sadd.s32 %s70, 1
      %p74 = scmp.eq.s32.totalorder %s15, 1
      %p75 = scmp.ne.s32.totalorder %s70, %s72
      %p76 = scmp.eq.s32.totalorder %s15, 0
      %p77 = por %p75, %p76
      %p78 = scmp.ne.s32.totalorder %s70, %s72
      %p79 = scmp.eq.s32.totalorder %s20, 1
      %p80 = por %p78, %p79
      %p81 = scmp.ne.s32.totalorder %s72, %s73
      %p82 = scmp.eq.s32.totalorder %s20, 0
      %p83 = por %p81, %p82
      %p84 = scmp.ne.s32.totalorder %s72, %s73
      %p85 = scmp.eq.s32.totalorder %s21, 1
      %p86 = por %p84, %p85
      %p88 = scmp.ne.s32.totalorder %s73, %s87
      %p89 = scmp.eq.s32.totalorder %s21, 0
      %p90 = por %p88, %p89
      %s92 = sadd.s32 %s91, 1
      %p95 = scmp.eq.s32.totalorder %s15, 1
      %p96 = scmp.ne.s32.totalorder %s91, %s93
      %p97 = scmp.eq.s32.totalorder %s15, 0
      %p98 = por %p96, %p97
      %p99 = scmp.ne.s32.totalorder %s91, %s93
      %p100 = scmp.eq.s32.totalorder %s20, 1
      %p101 = por %p99, %p100
      %p102 = scmp.ne.s32.totalorder %s93, %s94
      %p103 = scmp.eq.s32.totalorder %s20, 0
      %p104 = por %p102, %p103
      %p105 = scmp.ne.s32.totalorder %s93, %s94
      %p106 = scmp.eq.s32.totalorder %s21, 1
      %p107 = por %p105, %p106
      %p109 = scmp.ne.s32.totalorder %s94, %s108
      %p110 = scmp.eq.s32.totalorder %s21, 0
      %p111 = por %p109, %p110
      %s113 = sadd.s32 %s112, 1
      %p116 = scmp.eq.s32.totalorder %s15, 1
      %p117 = scmp.ne.s32.totalorder %s112, %s114
      %p118 = scmp.eq.s32.totalorder %s15, 0
      %p119 = por %p117, %p118
      %p120 = scmp.ne.s32.totalorder %s112, %s114
      %p121 = scmp.eq.s32.totalorder %s20, 1
      %p122 = por %p120, %p121
      %p123 = scmp.ne.s32.totalorder %s114, %s115
      %p124 = scmp.eq.s32.totalorder %s20, 0
      %p125 = por %p123, %p124
      %p126 = scmp.ne.s32.totalorder %s114, %s115
      %p127 = scmp.eq.s32.totalorder %s21, 1
      %p128 = por %p126, %p127
      %p130 = scmp.ne.s32.totalorder %s115, %s129
      %p131 = scmp.eq.s32.totalorder %s21, 0
      %p132 = por %p130, %p131
      %s134 = sadd.s32 %s133, 1
      %p137 = scmp.eq.s32.totalorder %s15, 1
      %p138 = scmp.ne.s32.totalorder %s133, %s135
      %p139 = scmp.eq.s32.totalorder %s15, 0
      %p140 = por %p138, %p139
      %p141 = scmp.ne.s32.totalorder %s133, %s135
      %p142 = scmp.eq.s32.totalorder %s20, 1
      %p143 = por %p141, %p142
      %p144 = scmp.ne.s32.totalorder %s135, %s136
      %p145 = scmp.eq.s32.totalorder %s20, 0
      %p146 = por %p144, %p145
      %p147 = scmp.ne.s32.totalorder %s135, %s136
      %p148 = scmp.eq.s32.totalorder %s21, 1
      %p149 = por %p147, %p148
      %p151 = scmp.ne.s32.totalorder %s136, %s150
      %p152 = scmp.eq.s32.totalorder %s21, 0
      %p153 = por %p151, %p152
      %s155 = sadd.s32 %s154, 1
      %p158 = scmp.eq.s32.totalorder %s15, 1
      %p159 = scmp.ne.s32.totalorder %s154, %s156
      %p160 = scmp.eq.s32.totalorder %s15, 0
      %p161 = por %p159, %p160
      %p162 = scmp.ne.s32.totalorder %s154, %s156
      %p163 = scmp.eq.s32.totalorder %s20, 1
      %p164 = por %p162, %p163
      %p165 = scmp.ne.s32.totalorder %s156, %s157
      %p166 = scmp.eq.s32.totalorder %s20, 0
      %p167 = por %p165, %p166
      %p168 = scmp.ne.s32.totalorder %s156, %s157
      %p169 = scmp.eq.s32.totalorder %s21, 1
      %p170 = por %p168, %p169
      %p172 = scmp.ne.s32.totalorder %s157, %s171
      %p173 = scmp.eq.s32.totalorder %s21, 0
      %p174 = por %p172, %p173
      %s175 = ssub.s32 %s15, %s22
      %p176 = scmp.eq.s32.totalorder %s175, 0
      %s178 = sadd.s32 %s177, 1
      %s179 = scalar_select %p176, %s177, %s178
      %p182 = pneg %p176
      %p183 = scmp.eq.s32.totalorder %s15, 1
      %p184 = por %p182, %p183
      %p185 = scmp.ne.s32.totalorder %s177, %s180
      %p186 = scmp.eq.s32.totalorder %s15, 0
      %p187 = por %p185, %p186
      %p188 = scmp.ne.s32.totalorder %s177, %s180
      %p189 = scmp.eq.s32.totalorder %s20, 1
      %p190 = por %p188, %p189
      %p191 = scmp.ne.s32.totalorder %s180, %s181
      %p192 = scmp.eq.s32.totalorder %s20, 0
      %p193 = por %p191, %p192
      %p194 = scmp.ne.s32.totalorder %s180, %s181
      %p195 = scmp.eq.s32.totalorder %s21, 1
      %p196 = por %p194, %p195
      %p198 = scmp.ne.s32.totalorder %s181, %s197
      %p199 = scmp.eq.s32.totalorder %s21, 0
      %p200 = por %p198, %p199
      %p201 = scmp.le.s32.totalorder 1, %s15
      %p202 = scmp.lt.s32.totalorder %s15, 3
      %p203 = pnand %p201, %p202
      %p204 = pneg %p203
      // Predicated region
      $region9: #{dqn_forward.1} parent=5 // pred_check
        _
      $region10: #{dqn_forward.1} parent=5 // pred_check_branch
        %206 = sbr.rel (%p203) target = $region12
      $region11: #{dqn_forward.1} parent=5 // pred_region
        %s207 = ssub.s32 %s15, 1
        // Predicated region
        $region13: #{dqn_forward.1} parent=11 // pred_check
          %p208 = pneg %p62
        $region14: #{dqn_forward.1} parent=11 // pred_check_branch
          %210 = sbr.rel (%p208) target = $region16
        $region15: #{dqn_forward.1} parent=11 // pred_region
          %s212 = ssub.s32 512, 512
          %213 = vsyncadd [#allocation3], %s212
          %s214 = sshll.u32 [#allocation2], 4
          %s215 = int_to_ptr.vmem [resolvable:$true] %s214
          %220 = dma.hbm_to_vmem [thread:$0]  %s1, 512, %s215, [#allocation3], 128, 128, 8
        $region16: #{dqn_forward.1} parent=11 // pred_fallthru
          _
        // Predicated region
        $region17: #{dqn_forward.1} parent=11 // pred_check
          %p221 = pneg %p83
        $region18: #{dqn_forward.1} parent=11 // pred_check_branch
          %223 = sbr.rel (%p221) target = $region20
        $region19: #{dqn_forward.1} parent=11 // pred_region
          _
        $region20: #{dqn_forward.1} parent=11 // pred_fallthru
          _
        // Predicated region
        $region21: #{dqn_forward.1} parent=11 // pred_check
          %p224 = pneg %p104
        $region22: #{dqn_forward.1} parent=11 // pred_check_branch
          %226 = sbr.rel (%p224) target = $region24
        $region23: #{dqn_forward.1} parent=11 // pred_region
          %s228 = ssub.s32 512, 512
          %229 = vsyncadd [#allocation5], %s228
          %s230 = sshll.u32 [#allocation4], 4
          %s231 = int_to_ptr.vmem [resolvable:$true] %s230
          %236 = dma.hbm_to_vmem [thread:$0]  %s3, 512, %s231, [#allocation5], 128, 128, 8
        $region24: #{dqn_forward.1} parent=11 // pred_fallthru
          _
        // Predicated region
        $region25: #{dqn_forward.1} parent=11 // pred_check
          %p237 = pneg %p125
        $region26: #{dqn_forward.1} parent=11 // pred_check_branch
          %239 = sbr.rel (%p237) target = $region28
        $region27: #{dqn_forward.1} parent=11 // pred_region
          _
        $region28: #{dqn_forward.1} parent=11 // pred_fallthru
          _
        // Predicated region
        $region29: #{dqn_forward.1} parent=11 // pred_check
          %p240 = pneg %p146
        $region30: #{dqn_forward.1} parent=11 // pred_check_branch
          %242 = sbr.rel (%p240) target = $region32
        $region31: #{dqn_forward.1} parent=11 // pred_region
          _
        $region32: #{dqn_forward.1} parent=11 // pred_fallthru
          _
        // Predicated region
        $region33: #{dqn_forward.1} parent=11 // pred_check
          %p243 = pneg %p167
        $region34: #{dqn_forward.1} parent=11 // pred_check_branch
          %245 = sbr.rel (%p243) target = $region36
        $region35: #{dqn_forward.1} parent=11 // pred_region
          _
        $region36: #{dqn_forward.1} parent=11 // pred_fallthru
          _
      $region12: #{dqn_forward.1} parent=5 // pred_fallthru
        _
      %p246 = scmp.lt.s32.totalorder %s15, 2
      // Predicated region
      $region37: #{dqn_forward.1} parent=5 // pred_check
        %p247 = pneg %p246
      $region38: #{dqn_forward.1} parent=5 // pred_check_branch
        %249 = sbr.rel (%p247) target = $region40
      $region39: #{dqn_forward.1} parent=5 // pred_region
        // Predicated region
        $region41: #{dqn_forward.1} parent=39 // pred_check
          %p250 = pneg %p35
        $region42: #{dqn_forward.1} parent=39 // pred_check_branch
          %252 = sbr.rel (%p250) target = $region44
        $region43: #{dqn_forward.1} parent=39 // pred_region
          %s253 = smul.u32 2, %s15
          %p254 = scmp.lt.s32.totalorder %s253, 3
          %s255 = scalar_select %p254, %s253, 3
          %s256 = smul.addr %s255, 8
          %s257 = scalar_lea.vmem %s0, %s256
          %s258 = smul.u32 2, %s15
        $region44: #{dqn_forward.1} parent=39 // pred_fallthru
          _
      $region40: #{dqn_forward.1} parent=5 // pred_fallthru
        _
      %p259 = scmp.le.s32.totalorder 1, %s15
      %p260 = scmp.lt.s32.totalorder %s15, 3
      %p261 = pnand %p259, %p260
      %p262 = pneg %p261
      // Predicated region
      $region45: #{dqn_forward.1} parent=5 // pred_check
        _
      $region46: #{dqn_forward.1} parent=5 // pred_check_branch
        %264 = sbr.rel (%p261) target = $region48
      $region47: #{dqn_forward.1} parent=5 // pred_region
        %s265 = ssub.s32 %s15, 1
        // Predicated region
        $region49: #{dqn_forward.1} parent=47 // pred_check
          %p266 = pneg %p62
        $region50: #{dqn_forward.1} parent=47 // pred_check_branch
          %268 = sbr.rel (%p266) target = $region52
        $region51: #{dqn_forward.1} parent=47 // pred_region
          %269 = dma.done [#allocation3], 512
        $region52: #{dqn_forward.1} parent=47 // pred_fallthru
          _
        // Predicated region
        $region53: #{dqn_forward.1} parent=47 // pred_check
          %p270 = pneg %p104
        $region54: #{dqn_forward.1} parent=47 // pred_check_branch
          %272 = sbr.rel (%p270) target = $region56
        $region55: #{dqn_forward.1} parent=47 // pred_region
          %273 = dma.done [#allocation5], 512
        $region56: #{dqn_forward.1} parent=47 // pred_fallthru
          _
        %s274 = smul.u32 2, %s20
        %p275 = scmp.lt.s32.totalorder %s274, 3
        %s276 = scalar_select %p275, %s274, 3
        %s277 = smul.addr %s276, 8
        %s278 = scalar_lea.vmem %s0, %s277
        %p279 = pneg %p41
        %p280 = pneg %p38
        %p281 = pneg %p62
        %p282 = pneg %p59
        %p283 = pneg %p83
        %p284 = pneg %p80
        %p285 = pneg %p104
        %p286 = pneg %p101
        %p287 = pneg %p125
        %p288 = pneg %p122
        %p289 = pneg %p146
        %p290 = pneg %p143
        %p291 = pneg %p167
        %p292 = pneg %p164
        %p293 = pneg %p193
        %p294 = pneg %p190
        %s295 = smul.u32 2, %s20
        %p296 = scmp.lt.s32.totalorder %s295, 3
        %s297 = scalar_select %p296, %s295, 3
        %s298 = smul.addr %s297, 8
        %s299 = scalar_lea.vmem %s7, %s298
        %s300 = smul.u32 2, %s20
        %p301 = scmp.lt.s32.totalorder %s300, 3
        %s302 = scalar_select %p301, %s300, 3
        %s303 = smul.addr %s302, 8
        %s304 = scalar_lea.vmem %s0, %s303
        %s305 = smul.u32 2, %s20
        %s306 = smul.u32 2, %s20
        %p307 = scmp.lt.s32.totalorder %s306, 3
        %s308 = scalar_select %p307, %s306, 3
        %s309 = smul.addr %s308, 8
        %s310 = scalar_lea.vmem %s7, %s309
        %s311 = smul.u32 2, %s20
        %v312 = vld [vmem:[%s304] sm:$0xff]
        %v313 = vld [vmem:[%s304 + $0x8] sm:$0xff]
        %v314 = vld [vmem:[#allocation2] sm:$0xff]
        %v315 = vld [vmem:[#allocation2 + $0x8] sm:$0xff]
        %v316 = vld [vmem:[#allocation2 + $0x10] sm:$0xff]
        %v317 = vld [vmem:[#allocation2 + $0x18] sm:$0xff]
        %v318 = vld [vmem:[%s2] sm:$0x1]
        %v320 = vlaneseq
        %v321 = vshrl.u32 %v320, 7
        %v322 = vsub.s32 0, %v321
        %v323 = vrot.slane %v318, %v322
        %vm325 = vcmask 261120
        %v327 = vsel %vm325, %v312, 0
        %v330 = vsel %vm325, %v313, 0
        %332 = vmatprep.subr.mxu0 0.0
        %333 = vmatpush1.msra.mxu0 0.0
        %334 = vmatprep.subr.mxu0 0.0
        %335 = vmatpush1.msra.mxu0 0.0
        %336 = vmatprep.subr.mxu0 0.0
        %337 = vmatpush1.msra.mxu0 0.0
        %338 = vmatprep.subr.mxu0 0.0
        %339 = vmatpush1.msra.mxu0 0.0
        %340 = vmatprep.subr.mxu0 0.0
        %341 = vmatpush1.msra.mxu0 0.0
        %342 = vmatprep.subr.mxu0 0.0
        %343 = vmatpush1.msra.mxu0 0.0
        %344 = vmatprep.subr.mxu0 0.0
        %345 = vmatpush1.msra.mxu0 0.0
        %346 = vmatprep.subr.mxu0 0.0
        %347 = vmatpush1.msra.mxu0 0.0
        %348 = vmatprep.subr.mxu0 0.0
        %349 = vmatpush1.msra.mxu0 0.0
        %350 = vmatprep.subr.mxu0 0.0
        %351 = vmatpush1.msra.mxu0 0.0
        %352 = vmatprep.subr.mxu0 0.0
        %353 = vmatpush1.msra.mxu0 0.0
        %354 = vmatprep.subr.mxu0 0.0
        %355 = vmatpush1.msra.mxu0 0.0
        %356 = vmatprep.subr.mxu0 0.0
        %357 = vmatpush1.msra.mxu0 %v317
        %358 = vmatprep.subr.mxu0 0.0
        %359 = vmatpush1.msra.mxu0 %v316
        %360 = vmatprep.subr.mxu0 0.0
        %361 = vmatpush1.msra.mxu0 %v315
        %362 = vmatprep.subr.mxu0 0.0
        %363 = vmatpush1.msra.mxu0 %v314
        %364 = vmatprep.subr.mxu0 0.0
        %365 = vmatpush2.msra.mxu0 0.0
        %366 = vmatprep.subr.mxu0 0.0
        %367 = vmatpush2.msra.mxu0 0.0
        %368 = vmatprep.subr.mxu0 0.0
        %369 = vmatpush2.msra.mxu0 0.0
        %370 = vmatprep.subr.mxu0 0.0
        %371 = vmatpush2.msra.mxu0 0.0
        %372 = vmatprep.subr.mxu0 0.0
        %373 = vmatpush2.msra.mxu0 0.0
        %374 = vmatprep.subr.mxu0 0.0
        %375 = vmatpush2.msra.mxu0 0.0
        %376 = vmatprep.subr.mxu0 0.0
        %377 = vmatpush2.msra.mxu0 0.0
        %378 = vmatprep.subr.mxu0 0.0
        %379 = vmatpush2.msra.mxu0 0.0
        %380 = vmatprep.subr.mxu0 0.0
        %381 = vmatpush2.msra.mxu0 0.0
        %382 = vmatprep.subr.mxu0 0.0
        %383 = vmatpush2.msra.mxu0 0.0
        %384 = vmatprep.subr.mxu0 0.0
        %385 = vmatpush2.msra.mxu0 0.0
        %386 = vmatprep.subr.mxu0 0.0
        %387 = vmatpush2.msra.mxu0 0.0
        %388 = vmatprep.subr.mxu0 0.0
        %389 = vmatpush2.msra.mxu0 0.0
        %390 = vmatprep.subr.mxu0 0.0
        %391 = vmatpush2.msra.mxu0 0.0
        %392 = vmatprep.subr.mxu0 0.0
        %393 = vmatpush2.msra.mxu0 0.0
        %394 = vmatprep.subr.mxu0 0.0
        %395 = vmatpush2.msra.mxu0 0.0
        %396 = vmatprep.mubr.f32.mxu0 0.0
        %397 = vmatmul.mubr.f32.gmra.mxu0 %v327
        %v398 = vpop.f32.mrf.mxu0
        %v399 = vadd.f32 %v323, %v398
        %v400 = vpop.f32.mrf.mxu0
        %401 = vmatprep.mubr.f32.mxu0 0.0
        %402 = vmatmul.mubr.f32.gmra.mxu0 %v330
        %v403 = vpop.f32.mrf.mxu0
        %v404 = vadd.f32 %v323, %v403
        %v405 = vpop.f32.mrf.mxu0
        %406 = vdwg.mxu0
        %v407 = vmax.f32 %v399, 0.0
        %v408 = vmax.f32 %v404, 0.0
        %v409 = vld [vmem:[#allocation4] sm:$0xff]
        %v410 = vld [vmem:[#allocation4 + $0x8] sm:$0xff]
        %v411 = vld [vmem:[#allocation4 + $0x10] sm:$0xff]
        %v412 = vld [vmem:[#allocation4 + $0x18] sm:$0xff]
        %v413 = vld [vmem:[%s4] sm:$0x1]
        %v415 = vlaneseq
        %v416 = vshrl.u32 %v415, 7
        %v417 = vsub.s32 0, %v416
        %v418 = vrot.slane %v413, %v417
        %v421 = vsel %vm325, %v407, 0
        %v424 = vsel %vm325, %v408, 0
        %426 = vmatprep.subr.mxu0 0.0
        %427 = vmatpush1.msra.mxu0 0.0
        %428 = vmatprep.subr.mxu0 0.0
        %429 = vmatpush1.msra.mxu0 0.0
        %430 = vmatprep.subr.mxu0 0.0
        %431 = vmatpush1.msra.mxu0 0.0
        %432 = vmatprep.subr.mxu0 0.0
        %433 = vmatpush1.msra.mxu0 0.0
        %434 = vmatprep.subr.mxu0 0.0
        %435 = vmatpush1.msra.mxu0 0.0
        %436 = vmatprep.subr.mxu0 0.0
        %437 = vmatpush1.msra.mxu0 0.0
        %438 = vmatprep.subr.mxu0 0.0
        %439 = vmatpush1.msra.mxu0 0.0
        %440 = vmatprep.subr.mxu0 0.0
        %441 = vmatpush1.msra.mxu0 0.0
        %442 = vmatprep.subr.mxu0 0.0
        %443 = vmatpush1.msra.mxu0 0.0
        %444 = vmatprep.subr.mxu0 0.0
        %445 = vmatpush1.msra.mxu0 0.0
        %446 = vmatprep.subr.mxu0 0.0
        %447 = vmatpush1.msra.mxu0 0.0
        %448 = vmatprep.subr.mxu0 0.0
        %449 = vmatpush1.msra.mxu0 0.0
        %450 = vmatprep.subr.mxu0 0.0
        %451 = vmatpush1.msra.mxu0 %v412
        %452 = vmatprep.subr.mxu0 0.0
        %453 = vmatpush1.msra.mxu0 %v411
        %454 = vmatprep.subr.mxu0 0.0
        %455 = vmatpush1.msra.mxu0 %v410
        %456 = vmatprep.subr.mxu0 0.0
        %457 = vmatpush1.msra.mxu0 %v409
        %458 = vmatprep.subr.mxu0 0.0
        %459 = vmatpush2.msra.mxu0 0.0
        %460 = vmatprep.subr.mxu0 0.0
        %461 = vmatpush2.msra.mxu0 0.0
        %462 = vmatprep.subr.mxu0 0.0
        %463 = vmatpush2.msra.mxu0 0.0
        %464 = vmatprep.subr.mxu0 0.0
        %465 = vmatpush2.msra.mxu0 0.0
        %466 = vmatprep.subr.mxu0 0.0
        %467 = vmatpush2.msra.mxu0 0.0
        %468 = vmatprep.subr.mxu0 0.0
        %469 = vmatpush2.msra.mxu0 0.0
        %470 = vmatprep.subr.mxu0 0.0
        %471 = vmatpush2.msra.mxu0 0.0
        %472 = vmatprep.subr.mxu0 0.0
        %473 = vmatpush2.msra.mxu0 0.0
        %474 = vmatprep.subr.mxu0 0.0
        %475 = vmatpush2.msra.mxu0 0.0
        %476 = vmatprep.subr.mxu0 0.0
        %477 = vmatpush2.msra.mxu0 0.0
        %478 = vmatprep.subr.mxu0 0.0
        %479 = vmatpush2.msra.mxu0 0.0
        %480 = vmatprep.subr.mxu0 0.0
        %481 = vmatpush2.msra.mxu0 0.0
        %482 = vmatprep.subr.mxu0 0.0
        %483 = vmatpush2.msra.mxu0 0.0
        %484 = vmatprep.subr.mxu0 0.0
        %485 = vmatpush2.msra.mxu0 0.0
        %486 = vmatprep.subr.mxu0 0.0
        %487 = vmatpush2.msra.mxu0 0.0
        %488 = vmatprep.subr.mxu0 0.0
        %489 = vmatpush2.msra.mxu0 0.0
        %490 = vmatprep.mubr.f32.mxu0 0.0
        %491 = vmatmul.mubr.f32.gmra.mxu0 %v421
        %v492 = vpop.f32.mrf.mxu0
        %v493 = vadd.f32 %v418, %v492
        %v494 = vpop.f32.mrf.mxu0
        %495 = vmatprep.mubr.f32.mxu0 0.0
        %496 = vmatmul.mubr.f32.gmra.mxu0 %v424
        %v497 = vpop.f32.mrf.mxu0
        %v498 = vadd.f32 %v418, %v497
        %v499 = vpop.f32.mrf.mxu0
        %500 = vdwg.mxu0
        %v501 = vmax.f32 %v493, 0.0
        %v502 = vmax.f32 %v498, 0.0
        %v503 = vld [vmem:[%s5] sm:$0xff]
        %v504 = vld [vmem:[%s5 + $0x8] sm:$0xff]
        %v505 = vld [vmem:[%s5 + $0x10] sm:$0xff]
        %v506 = vld [vmem:[%s5 + $0x18] sm:$0xff]
        %v507 = vld [vmem:[%s6] sm:$0x1]
        %v509 = vlaneseq
        %v510 = vshrl.u32 %v509, 7
        %v511 = vsub.s32 0, %v510
        %v512 = vrot.slane %v507, %v511
        %v515 = vsel %vm325, %v501, 0
        %v518 = vsel %vm325, %v502, 0
        %520 = vmatprep.subr.mxu0 0.0
        %521 = vmatpush1.msra.mxu0 0.0
        %522 = vmatprep.subr.mxu0 0.0
        %523 = vmatpush1.msra.mxu0 0.0
        %524 = vmatprep.subr.mxu0 0.0
        %525 = vmatpush1.msra.mxu0 0.0
        %526 = vmatprep.subr.mxu0 0.0
        %527 = vmatpush1.msra.mxu0 0.0
        %528 = vmatprep.subr.mxu0 0.0
        %529 = vmatpush1.msra.mxu0 0.0
        %530 = vmatprep.subr.mxu0 0.0
        %531 = vmatpush1.msra.mxu0 0.0
        %532 = vmatprep.subr.mxu0 0.0
        %533 = vmatpush1.msra.mxu0 0.0
        %534 = vmatprep.subr.mxu0 0.0
        %535 = vmatpush1.msra.mxu0 0.0
        %536 = vmatprep.subr.mxu0 0.0
        %537 = vmatpush1.msra.mxu0 0.0
        %538 = vmatprep.subr.mxu0 0.0
        %539 = vmatpush1.msra.mxu0 0.0
        %540 = vmatprep.subr.mxu0 0.0
        %541 = vmatpush1.msra.mxu0 0.0
        %542 = vmatprep.subr.mxu0 0.0
        %543 = vmatpush1.msra.mxu0 0.0
        %544 = vmatprep.subr.mxu0 0.0
        %545 = vmatpush1.msra.mxu0 %v506
        %546 = vmatprep.subr.mxu0 0.0
        %547 = vmatpush1.msra.mxu0 %v505
        %548 = vmatprep.subr.mxu0 0.0
        %549 = vmatpush1.msra.mxu0 %v504
        %550 = vmatprep.subr.mxu0 0.0
        %551 = vmatpush1.msra.mxu0 %v503
        %552 = vmatprep.subr.mxu0 0.0
        %553 = vmatpush2.msra.mxu0 0.0
        %554 = vmatprep.subr.mxu0 0.0
        %555 = vmatpush2.msra.mxu0 0.0
        %556 = vmatprep.subr.mxu0 0.0
        %557 = vmatpush2.msra.mxu0 0.0
        %558 = vmatprep.subr.mxu0 0.0
        %559 = vmatpush2.msra.mxu0 0.0
        %560 = vmatprep.subr.mxu0 0.0
        %561 = vmatpush2.msra.mxu0 0.0
        %562 = vmatprep.subr.mxu0 0.0
        %563 = vmatpush2.msra.mxu0 0.0
        %564 = vmatprep.subr.mxu0 0.0
        %565 = vmatpush2.msra.mxu0 0.0
        %566 = vmatprep.subr.mxu0 0.0
        %567 = vmatpush2.msra.mxu0 0.0
        %568 = vmatprep.subr.mxu0 0.0
        %569 = vmatpush2.msra.mxu0 0.0
        %570 = vmatprep.subr.mxu0 0.0
        %571 = vmatpush2.msra.mxu0 0.0
        %572 = vmatprep.subr.mxu0 0.0
        %573 = vmatpush2.msra.mxu0 0.0
        %574 = vmatprep.subr.mxu0 0.0
        %575 = vmatpush2.msra.mxu0 0.0
        %576 = vmatprep.subr.mxu0 0.0
        %577 = vmatpush2.msra.mxu0 0.0
        %578 = vmatprep.subr.mxu0 0.0
        %579 = vmatpush2.msra.mxu0 0.0
        %580 = vmatprep.subr.mxu0 0.0
        %581 = vmatpush2.msra.mxu0 0.0
        %582 = vmatprep.subr.mxu0 0.0
        %583 = vmatpush2.msra.mxu0 0.0
        %584 = vmatprep.mubr.f32.mxu0 0.0
        %585 = vmatmul.mubr.f32.gmra.mxu0 %v515
        %v586 = vpop.f32.mrf.mxu0
        %v587 = vadd.f32 %v512, %v586
        %v588 = vpop.f32.mrf.mxu0
        %589 = vmatprep.mubr.f32.mxu0 0.0
        %590 = vmatmul.mubr.f32.gmra.mxu0 %v518
        %v591 = vpop.f32.mrf.mxu0
        %v592 = vadd.f32 %v512, %v591
        %v593 = vpop.f32.mrf.mxu0
        %594 = vdwg.mxu0
        %vm595 = vcmask 64512
        %596 = vst.msk [vmem:[%s310] sm:$0xff] %vm595, %v587
        %597 = vst.msk [vmem:[%s310 + $0x8] sm:$0xff] %vm595, %v592
        %s598 = smul.u32 2, %s20
        %p599 = scmp.lt.s32.totalorder %s598, 3
        %s600 = scalar_select %p599, %s598, 3
        %s601 = smul.addr %s600, 8
        %s602 = scalar_lea.vmem %s7, %s601
        // Predicated region
        $region57: #{dqn_forward.1} parent=47 // pred_check
          %p603 = pneg %p190
        $region58: #{dqn_forward.1} parent=47 // pred_check_branch
          %605 = sbr.rel (%p603) target = $region60
        $region59: #{dqn_forward.1} parent=47 // pred_region
          %s606 = smul.u32 2, %s20
        $region60: #{dqn_forward.1} parent=47 // pred_fallthru
          _
      $region48: #{dqn_forward.1} parent=5 // pred_fallthru
        _
      %p607 = scmp.le.s32.totalorder 2, %s15
      // Predicated region
      $region61: #{dqn_forward.1} parent=5 // pred_check
        %p608 = pneg %p607
      $region62: #{dqn_forward.1} parent=5 // pred_check_branch
        %610 = sbr.rel (%p608) target = $region64
      $region63: #{dqn_forward.1} parent=5 // pred_region
        %s611 = ssub.s32 %s15, 2
        // Predicated region
        $region65: #{dqn_forward.1} parent=63 // pred_check
          %p612 = pneg %p196
        $region66: #{dqn_forward.1} parent=63 // pred_check_branch
          %614 = sbr.rel (%p612) target = $region68
        $region67: #{dqn_forward.1} parent=63 // pred_region
          %s615 = smul.u32 2, %s21
          %p616 = scmp.lt.s32.totalorder %s615, 3
          %s617 = scalar_select %p616, %s615, 3
          %s618 = smul.addr %s617, 8
          %s619 = scalar_lea.vmem %s7, %s618
        $region68: #{dqn_forward.1} parent=63 // pred_fallthru
          _
      $region64: #{dqn_forward.1} parent=5 // pred_fallthru
        _
    $region6: #{dqn_forward.1} parent=1 // loop_footer
      %s19 = sadd.s32 1, %s15
    $region7: #{dqn_forward.1} parent=1 // loop_footer_branch
      %14 = sbr.rel target = $region3
    $region8: #{dqn_forward.1} parent=1 // loop_exit
      _
    %620 = vsyncpa [#allocation3], 1
    %s621 = scalar_lea.sflag [#allocation3], 1
    %622 = vsyncpa %s621, 1
    %623 = vsyncpa [#allocation5], 1

</llo_original>
